<compile_context>
chip_gen: v6e
topology: v6e:2x2x1
jax: 0.10.0
libtpu: 0.0.40
codegen_flags: <defaults>
</compile_context>

<pallas_src>
import functools

import jax
import jax.numpy as jnp
from jax.experimental import pallas as pl
from jax.experimental.pallas import tpu as pltpu

INPUT_SIZE = 50
HIDDEN_SIZE = 50
NUM_CLASSES = 2
LEAKY_SLOPE = 0.01  # PyTorch nn.LeakyReLU default negative_slope

_ROW_CHUNK = 2048    # rows of x processed per inner iteration (bounds live VMEM)
_MAX_TILE_B = 16384  # per-step DMA tile: ~3.3 MiB of f32 x per grid step


def _round_up(n, m):
    return ((n + m - 1) // m) * m


def _mlp_head_kernel(x_ref, w1_ref, cst_ref, o_ref, *, chunk, n_chunks):
    # x_ref  : (TILE_B, IN)        activation tile (f32 or bf16; cast to bf16)
    # w1_ref : (IN, HID)  bf16     first linear layer, (in, out) layout
    # cst_ref: (3, HID)   f32      row0=b1, row1=w2[1]-w2[0], row2[0]=b2[1]-b2[0]
    # o_ref  : (2, TILE_B) f32     row0 = P(class 0), row1 = P(class 1)
    w1 = w1_ref[...]                                  # (IN, HID) bf16
    b1 = cst_ref[0:1, :]                              # (1, HID)  f32
    wd = cst_ref[1:2, :].astype(jnp.bfloat16)         # (1, HID)  bf16
    bd = cst_ref[2:3, 0:1]                            # (1, 1)    f32

    def process(r, rows):
        # ---- Linear 1 on the MXU (bf16 operands, f32 accumulation) ----
        x = x_ref[pl.ds(r, rows), :].astype(jnp.bfloat16)
        h = jnp.dot(x, w1, preferred_element_type=jnp.float32) + b1
        # ---- LeakyReLU (f32, VPU) ----
        h = jnp.where(h > 0, h, LEAKY_SLOPE * h)
        # ---- Collapsed 2-class head, contracting the last dims of both
        #      operands (A.B^T form -> no materialized transpose of h), so the
        #      batch lands on the 128-lane axis of the result. ----
        d = jax.lax.dot_general(
            wd, h.astype(jnp.bfloat16),
            dimension_numbers=(((1,), (1,)), ((), ())),
            preferred_element_type=jnp.float32)
        d = d + bd                                    # (1, rows) f32
        # softmax([z0, z1]) = [1 - sigmoid(z1 - z0), sigmoid(z1 - z0)]
        # numerically stable; exp/recip go to the EUP (idle slot).
        p1 = pl.reciprocal(1.0 + jnp.exp(-d), approx=False)
        probs = jnp.concatenate([1.0 - p1, p1], axis=0)   # (2, rows), one store
        o_ref[:, pl.ds(r, rows)] = probs.astype(o_ref.dtype)

    if n_chunks == 1:
        process(0, chunk)
    else:
        def body(c, carry):
            process(pl.multiple_of(c * chunk, chunk), chunk)
            return carry
        jax.lax.fori_loop(0, n_chunks, body, 0)


def network_forward(x, w1, b1, w2, b2, *, max_tile_b=_MAX_TILE_B):
    """Forward pass of `Network` (Linear -> LeakyReLU -> Linear -> Softmax).

    Arguments use PyTorch's native layouts:
      x : (B, 50)  float32 or bfloat16.  Supplying bf16 halves the dominant
          HBM read of this memory-bound kernel (the cast happens in-kernel
          either way; do NOT pre-cast f32 -> bf16 in a wrapper).
      w1: (50, 50) nn.Linear weight, (out, in)
      b1: (50,)
      w2: (2, 50)  nn.Linear weight, (out, in)
      b2: (2,)
    Returns softmax probabilities, shape (B, 2), float32.
    """
    B = x.shape[0]
    assert x.shape[1] == INPUT_SIZE

    # ---- Tile selection ----------------------------------------------------
    # Aim for >= 4 grid steps (pipelining + both v7x TCs), 128-row multiples,
    # capped at max_tile_b.  Tiles above _ROW_CHUNK are made a multiple of the
    # inner chunk so the in-kernel loop is uniform.
    tile_b = max(128, _round_up(pl.cdiv(B, 4), 128))
    tile_b = min(tile_b, max(128, max_tile_b))
    if tile_b > _ROW_CHUNK:
        tile_b = max(_ROW_CHUNK, (tile_b // _ROW_CHUNK) * _ROW_CHUNK)
    chunk = min(tile_b, _ROW_CHUNK)
    n_chunks = tile_b // chunk
    grid = (pl.cdiv(B, tile_b),)   # no padding of x: trailing block is partial

    # ---- Tiny weight-side prep (negligible HBM traffic) --------------------
    w1_t = jnp.asarray(w1, jnp.float32).T.astype(jnp.bfloat16)     # (IN, HID)
    wd = (w2[1, :] - w2[0, :]).astype(jnp.float32)                 # (HID,)
    bd_row = jnp.zeros((HIDDEN_SIZE,), jnp.float32).at[0].set(
        (b2[1] - b2[0]).astype(jnp.float32))
    consts = jnp.stack([jnp.asarray(b1, jnp.float32), wd, bd_row])  # (3, HID)

    kernel = functools.partial(_mlp_head_kernel, chunk=chunk, n_chunks=n_chunks)

    # VMEM: double-buffered x tile (lane-padded to 128) + double-buffered out
    # block + per-chunk intermediates + weights; ~20 MiB worst case.  Set the
    # scoped limit explicitly so v5e (16 MiB default) compiles at large tiles.
    vmem_limit = 40 * 1024 * 1024

    out_t = pl.pallas_call(
        kernel,
        out_shape=jax.ShapeDtypeStruct((NUM_CLASSES, B), jnp.float32),
        grid=grid,
        in_specs=[
            pl.BlockSpec((tile_b, INPUT_SIZE), lambda i: (i, 0)),        # x tile
            pl.BlockSpec((INPUT_SIZE, HIDDEN_SIZE), lambda i: (0, 0)),   # w1 (resident)
            pl.BlockSpec((3, HIDDEN_SIZE), lambda i: (0, 0)),            # consts
        ],
        out_specs=pl.BlockSpec((NUM_CLASSES, tile_b), lambda i: (0, i)),
        compiler_params=pltpu.CompilerParams(
            dimension_semantics=("parallel",),
            vmem_limit_bytes=vmem_limit),
    )(x, w1_t, consts)

    # (2, B) lane-dense kernel output -> (B, 2); tiny wrapper transpose.
    return out_t.T


def init_params(key):
    """Deterministic init mimicking nn.Linear's U(-1/sqrt(fan_in), 1/sqrt(fan_in)).

    Weights are in PyTorch-native (out, in) layout."""
    k1, k2, k3, k4 = jax.random.split(key, 4)
    bound1 = 1.0 / (INPUT_SIZE ** 0.5)
    bound2 = 1.0 / (HIDDEN_SIZE ** 0.5)
    w1 = jax.random.uniform(k1, (HIDDEN_SIZE, INPUT_SIZE), jnp.float32, -bound1, bound1)
    b1 = jax.random.uniform(k2, (HIDDEN_SIZE,), jnp.float32, -bound1, bound1)
    w2 = jax.random.uniform(k3, (NUM_CLASSES, HIDDEN_SIZE), jnp.float32, -bound2, bound2)
    b2 = jax.random.uniform(k4, (NUM_CLASSES,), jnp.float32, -bound2, bound2)
    return w1, b1, w2, b2


def _reference(x, w1, b1, w2, b2):
    """Plain-JAX f32 reference with the PyTorch module's exact semantics."""
    h = x @ w1.T + b1
    h = jnp.where(h > 0, h, LEAKY_SLOPE * h)
    logits = h @ w2.T + b2
    return jax.nn.softmax(logits, axis=1)


def _check(x, params, name):
    w1, b1, w2, b2 = params
    out = jax.block_until_ready(network_forward(x, w1, b1, w2, b2))
    ref = _reference(x, w1, b1, w2, b2)
    assert out.shape == (x.shape[0], NUM_CLASSES), name
    assert jnp.allclose(out, ref, atol=2e-2), f"{name}: probability mismatch"
    assert jnp.allclose(jnp.sum(out, axis=1), 1.0, atol=1e-5), f"{name}: rows !sum to 1"


if __name__ == "__main__":
    key = jax.random.PRNGKey(0)
    k_params, k_x1, k_x2, k_x3 = jax.random.split(key, 4)
    params = init_params(k_params)

    # Tiny batch: single 128-row tile, partial block on both input and output.
    _check(jax.random.normal(k_x1, (8, INPUT_SIZE), jnp.float32), params, "small")

    # Multi-step grid with a ragged trailing block (no wrapper-side padding).
    _check(jax.random.normal(k_x2, (300, INPUT_SIZE), jnp.float32), params, "multi-tile")

    # Larger batch: exercises the in-kernel chunk loop (tile_b > _ROW_CHUNK)
    # plus a ragged trailing block.
    _check(jax.random.normal(k_x3, (16500, INPUT_SIZE), jnp.float32), params, "chunked")

    print("KERNEL_OK")
</pallas_src>

<mosaic_0001>
module attributes {stable_mosaic.version = 11 : i64} {
  func.func @_mlp_head_kernel(%arg0: i32, %arg1: memref<128x50xf32, #tpu.memory_space<vmem>>, %arg2: memref<50x50xbf16, #tpu.memory_space<vmem>>, %arg3: memref<3x50xf32, #tpu.memory_space<vmem>>, %arg4: memref<2x128xf32, #tpu.memory_space<vmem>>) attributes {dimension_semantics = [#tpu.dimension_semantics<parallel>], iteration_bounds = array<i64: 1>, scalar_prefetch = 0 : i64, scratch_operands = 0 : i64, tpu.core_type = #tpu.core_type<tc>, window_params = [{transform_indices = @transform_0, window_bounds = array<i64: 128, 50>}, {pipeline_mode = #tpu.pipeline_mode<synchronous>, transform_indices = @transform_1, window_bounds = array<i64: 50, 50>}, {pipeline_mode = #tpu.pipeline_mode<synchronous>, transform_indices = @transform_2, window_bounds = array<i64: 3, 50>}, {transform_indices = @transform_3, window_bounds = array<i64: 2, 128>}]} {
    %c0 = arith.constant 0 : index
    %c0_0 = arith.constant 0 : index
    %0 = vector.load %arg2[%c0, %c0_0] : memref<50x50xbf16, #tpu.memory_space<vmem>>, vector<50x50xbf16>
    %c0_1 = arith.constant 0 : index
    %c0_2 = arith.constant 0 : index
    %1 = vector.load %arg3[%c0_1, %c0_2] : memref<3x50xf32, #tpu.memory_space<vmem>>, vector<1x50xf32>
    %c1 = arith.constant 1 : index
    %c0_3 = arith.constant 0 : index
    %2 = vector.load %arg3[%c1, %c0_3] : memref<3x50xf32, #tpu.memory_space<vmem>>, vector<1x50xf32>
    %3 = arith.truncf %2 : vector<1x50xf32> to vector<1x50xbf16>
    %c2 = arith.constant 2 : index
    %c0_4 = arith.constant 0 : index
    %4 = vector.load %arg3[%c2, %c0_4] : memref<3x50xf32, #tpu.memory_space<vmem>>, vector<1x1xf32>
    %c0_5 = arith.constant 0 : index
    %c0_6 = arith.constant 0 : index
    %5 = vector.load %arg1[%c0_5, %c0_6] : memref<128x50xf32, #tpu.memory_space<vmem>>, vector<128x50xf32>
    %6 = arith.truncf %5 : vector<128x50xf32> to vector<128x50xbf16>
    %cst = arith.constant dense<0.000000e+00> : vector<128x50xf32>
    %7 = tpu.matmul %6, %0, %cst {dimension_numbers = #tpu.dot_dimension_numbers<[1], [0], [0], [1], [0, 0, 1, 1], [], []>} : vector<128x50xbf16>, vector<50x50xbf16>, vector<128x50xf32> -> vector<128x50xf32>
    %8 = vector.broadcast %1 : vector<1x50xf32> to vector<128x50xf32>
    %9 = arith.addf %7, %8 : vector<128x50xf32>
    %cst_7 = arith.constant 0.000000e+00 : f32
    %10 = vector.broadcast %cst_7 : f32 to vector<128x50xf32>
    %11 = arith.cmpf ogt, %9, %10 : vector<128x50xf32>
    %cst_8 = arith.constant 0.00999999977 : f32
    %12 = vector.broadcast %cst_8 : f32 to vector<128x50xf32>
    %13 = arith.mulf %12, %9 : vector<128x50xf32>
    %14 = arith.select %11, %9, %13 : vector<128x50xi1>, vector<128x50xf32>
    %15 = arith.truncf %14 : vector<128x50xf32> to vector<128x50xbf16>
    %cst_9 = arith.constant dense<0.000000e+00> : vector<1x128xf32>
    %16 = tpu.matmul %3, %15, %cst_9 {dimension_numbers = #tpu.dot_dimension_numbers<[1], [1], [0], [0], [0, 0, 1, 0], [], []>} : vector<1x50xbf16>, vector<128x50xbf16>, vector<1x128xf32> -> vector<1x128xf32>
    %17 = vector.broadcast %4 : vector<1x1xf32> to vector<1x128xf32>
    %18 = arith.addf %16, %17 : vector<1x128xf32>
    %cst_10 = arith.constant 0.000000e+00 : f32
    %19 = vector.broadcast %cst_10 : f32 to vector<1x128xf32>
    %20 = arith.subf %19, %18 : vector<1x128xf32>
    %21 = math.exp %20 : vector<1x128xf32>
    %cst_11 = arith.constant 1.000000e+00 : f32
    %22 = vector.broadcast %cst_11 : f32 to vector<1x128xf32>
    %23 = arith.addf %22, %21 : vector<1x128xf32>
    %24 = tpu.reciprocal %23 : vector<1x128xf32> -> vector<1x128xf32>
    %cst_12 = arith.constant 1.000000e+00 : f32
    %25 = vector.broadcast %cst_12 : f32 to vector<1x128xf32>
    %26 = arith.subf %25, %24 : vector<1x128xf32>
    %27 = tpu.concatenate %26, %24 in 0 : vector<1x128xf32>, vector<1x128xf32> -> vector<2x128xf32>
    %c0_13 = arith.constant 0 : index
    %c0_14 = arith.constant 0 : index
    %28 = vector.load %arg4[%c0_13, %c0_14] : memref<2x128xf32, #tpu.memory_space<vmem>>, vector<2x128xf32>
    tpu.vector_store %arg4[%c0_13, %c0_14], %27 {strides = array<i32>} : memref<2x128xf32, #tpu.memory_space<vmem>>, vector<2x128xf32>,
    return
  }
  func.func @transform_0(%arg0: i32) -> (i32, i32) {
    %c0_i32 = arith.constant 0 : i32
    %c0_i32_0 = arith.constant 0 : i32
    return %arg0, %c0_i32 : i32, i32
  }
  func.func @transform_1(%arg0: i32) -> (i32, i32) {
    %c0_i32 = arith.constant 0 : i32
    %c0_i32_0 = arith.constant 0 : i32
    %c0_i32_1 = arith.constant 0 : i32
    return %c0_i32, %c0_i32_0 : i32, i32
  }
  func.func @transform_2(%arg0: i32) -> (i32, i32) {
    %c0_i32 = arith.constant 0 : i32
    %c0_i32_0 = arith.constant 0 : i32
    %c0_i32_1 = arith.constant 0 : i32
    return %c0_i32, %c0_i32_0 : i32, i32
  }
  func.func @transform_3(%arg0: i32) -> (i32, i32) {
    %c0_i32 = arith.constant 0 : i32
    %c0_i32_0 = arith.constant 0 : i32
    return %c0_i32, %arg0 : i32, i32
  }
}

</mosaic_0001>

<llo_original>
// kernel: tpu_custom_call.1
$region0: #{tpu_custom_call.1}
  #allocation0 [shape = 'u32[]', space=smem, size = 0x4, offset = 0x4, fixed_abs, tag = 'smem constant byte address 0x4 - core index']
  #allocation1 [shape = 'u32[144,128]{1,0:T(1,128)}', space=vmem, size = 0x12000, scoped, tag = 'internal scratch']
  %s0 = inlined_call_operand.hbm [shape: f32[8,50], index: 0, kind: input, shape index: {}]
  %s1 = inlined_call_operand.hbm [shape: bf16[50,50], index: 1, kind: input, shape index: {}]
  %s2 = inlined_call_operand.hbm [shape: f32[3,50], index: 2, kind: input, shape index: {}]
  %s3 = inlined_call_operand.hbm [shape: f32[2,8], index: 3, kind: output, shape index: {}]
  %s4 = sld [smem:[#allocation0]]
  $region34: #{tpu_custom_call.1} parent=0
    _
  %s6 = ssub.s32 1, %s4
  %s7 = scalar_select 0, %s6, %s4
  $region1: #{tpu_custom_call.1} parent=0
    #allocation2 [shape = 'u8[65536]{0}', space=vmem, size = 0x10000, scoped, tag = 'input window, operand 0, single buffered']
    #allocation3 [shape = 's32[1]{0}', space=sflag, size = 0x4, scoped, tag = 'scoped memory for tpu_custom_call.1']
    #allocation4 [shape = 's32[1]{0}', space=sflag, size = 0x4, scoped, tag = 'scoped memory for tpu_custom_call.1']
    #allocation5 [shape = 'u8[14336]{0}', space=vmem, size = 0x3800, scoped, tag = 'input window, operand 1, single buffered']
    #allocation6 [shape = 's32[1]{0}', space=sflag, size = 0x4, scoped, tag = 'scoped memory for tpu_custom_call.1']
    #allocation7 [shape = 'u8[2048]{0}', space=vmem, size = 0x800, scoped, tag = 'input window, operand 2, single buffered']
    #allocation8 [shape = 'u8[1024]{0}', space=vmem, size = 0x400, scoped, tag = 'output window, operand 0, single buffered']
    %8 = vsyncpa [#allocation3], 0
    %9 = vsyncpa [#allocation6], 0
    %10 = vsyncpa [#allocation4], 0
    // Predicated region
    $region2: #{tpu_custom_call.1} parent=1 // pred_check
      _
    $region3: #{tpu_custom_call.1} parent=1 // pred_check_branch
      %12 = sbr.rel (0) target = $region5
    $region4: #{tpu_custom_call.1} parent=1 // pred_region
      %s14 = ssub.s32 2048, 128
      %15 = vsyncadd [#allocation3], %s14
      %s16 = sshll.u32 [#allocation2], 4
      %s17 = int_to_ptr.vmem [resolvable:$true] %s16
      %22 = dma.hbm_to_vmem [thread:$0]  %s0, 128, %s17, [#allocation3], 128, 128, 8
    $region5: #{tpu_custom_call.1} parent=1 // pred_fallthru
      _
    // Predicated region
    $region6: #{tpu_custom_call.1} parent=1 // pred_check
      _
    $region7: #{tpu_custom_call.1} parent=1 // pred_check_branch
      %24 = sbr.rel (0) target = $region9
    $region8: #{tpu_custom_call.1} parent=1 // pred_region
      %s26 = ssub.s32 448, 448
      %27 = vsyncadd [#allocation6], %s26
      %s28 = sshll.u32 [#allocation5], 4
      %s29 = int_to_ptr.vmem [resolvable:$true] %s28
      %34 = dma.hbm_to_vmem [thread:$0]  %s1, 448, %s29, [#allocation6], 64, 64, 4
    $region9: #{tpu_custom_call.1} parent=1 // pred_fallthru
      _
    // Predicated region
    $region10: #{tpu_custom_call.1} parent=1 // pred_check
      _
    $region11: #{tpu_custom_call.1} parent=1 // pred_check_branch
      %36 = sbr.rel (0) target = $region13
    $region12: #{tpu_custom_call.1} parent=1 // pred_region
      %s38 = ssub.s32 64, 64
      %39 = vsyncadd [#allocation6], %s38
      %s41 = sshll.u32 [#allocation7], 4
      %s42 = int_to_ptr.vmem [resolvable:$true] %s41
      %44 = dma.hbm_to_vmem [thread:$0]  %s2, 64, %s42, [#allocation6]
    $region13: #{tpu_custom_call.1} parent=1 // pred_fallthru
      _
    // Predicated region
    $region14: #{tpu_custom_call.1} parent=1 // pred_check
      _
    $region15: #{tpu_custom_call.1} parent=1 // pred_check_branch
      %46 = sbr.rel (0) target = $region17
    $region16: #{tpu_custom_call.1} parent=1 // pred_region
      %47 = dma.done [#allocation3], 2048
    $region17: #{tpu_custom_call.1} parent=1 // pred_fallthru
      _
    // Predicated region
    $region18: #{tpu_custom_call.1} parent=1 // pred_check
      _
    $region19: #{tpu_custom_call.1} parent=1 // pred_check_branch
      %49 = sbr.rel (0) target = $region21
    $region20: #{tpu_custom_call.1} parent=1 // pred_region
      %50 = dma.done [#allocation6], 448
    $region21: #{tpu_custom_call.1} parent=1 // pred_fallthru
      _
    // Predicated region
    $region22: #{tpu_custom_call.1} parent=1 // pred_check
      _
    $region23: #{tpu_custom_call.1} parent=1 // pred_check_branch
      %52 = sbr.rel (0) target = $region25
    $region24: #{tpu_custom_call.1} parent=1 // pred_region
      %53 = dma.done [#allocation6], 64
    $region25: #{tpu_custom_call.1} parent=1 // pred_fallthru
      _
    %v55 = vld [vmem:[#allocation5] sm:$0xf]
    %v56 = vld [vmem:[#allocation5 + $0x4] sm:$0xf]
    %v57 = vld [vmem:[#allocation5 + $0x8] sm:$0xf]
    %v58 = vld [vmem:[#allocation5 + $0xc] sm:$0xf]
    %v59 = vld [vmem:[#allocation5 + $0x10] sm:$0xf]
    %v60 = vld [vmem:[#allocation5 + $0x14] sm:$0xf]
    %v61 = vld [vmem:[#allocation5 + $0x18] sm:$0x1]
    %v62 = vld [vmem:[#allocation7] sm:$0x1]
    %v63 = vld [vmem:[#allocation7 + $0x1] sm:$0x1]
    %v64 = vpack.c.bf16 %v63, %v63
    %v65 = vld [vmem:[#allocation7 + $0x2] sm:$0x1]
    %v66 = vld [vmem:[#allocation2] sm:$0xff]
    %v67 = vld [vmem:[#allocation2 + $0x8] sm:$0xff]
    %v68 = vld [vmem:[#allocation2 + $0x10] sm:$0xff]
    %v69 = vld [vmem:[#allocation2 + $0x18] sm:$0xff]
    %v70 = vld [vmem:[#allocation2 + $0x20] sm:$0xff]
    %v71 = vld [vmem:[#allocation2 + $0x28] sm:$0xff]
    %v72 = vld [vmem:[#allocation2 + $0x30] sm:$0xff]
    %v73 = vld [vmem:[#allocation2 + $0x38] sm:$0xff]
    %v74 = vld [vmem:[#allocation2 + $0x40] sm:$0xff]
    %v75 = vld [vmem:[#allocation2 + $0x48] sm:$0xff]
    %v76 = vld [vmem:[#allocation2 + $0x50] sm:$0xff]
    %v77 = vld [vmem:[#allocation2 + $0x58] sm:$0xff]
    %v78 = vld [vmem:[#allocation2 + $0x60] sm:$0xff]
    %v79 = vld [vmem:[#allocation2 + $0x68] sm:$0xff]
    %v80 = vld [vmem:[#allocation2 + $0x70] sm:$0xff]
    %v81 = vld [vmem:[#allocation2 + $0x78] sm:$0xff]
    %v82 = vpack.c.bf16 %v67, %v66
    %v83 = vpack.c.bf16 %v69, %v68
    %v84 = vpack.c.bf16 %v71, %v70
    %v85 = vpack.c.bf16 %v73, %v72
    %v86 = vpack.c.bf16 %v75, %v74
    %v87 = vpack.c.bf16 %v77, %v76
    %v88 = vpack.c.bf16 %v79, %v78
    %v89 = vpack.c.bf16 %v81, %v80
    %v90 = vlaneseq
    %v91 = vshrl.u32 %v90, 7
    %v92 = vsub.s32 0, %v91
    %v93 = vrot.slane %v62, %v92
    %v101 = vunpack.c.l.b16 %v55
    %v102 = vunpack.c.l.b16 %v56
    %v103 = vunpack.c.l.b16 %v57
    %v104 = vunpack.c.l.b16 %v58
    %v105 = vunpack.c.l.b16 %v59
    %v106 = vunpack.c.l.b16 %v60
    %v107 = vunpack.c.l.b16 %v61
    %v108 = vpack.c.b16 %v102, %v101
    %v109 = vpack.c.b16 %v104, %v103
    %v110 = vpack.c.b16 %v106, %v105
    %v111 = vpack.c.b16 %v107, %v107
    %vm115 = vcmask 408576
    %v117 = vsel %vm115, %v82, 0
    %v120 = vsel %vm115, %v83, 0
    %v123 = vsel %vm115, %v84, 0
    %v126 = vsel %vm115, %v85, 0
    %v129 = vsel %vm115, %v86, 0
    %v132 = vsel %vm115, %v87, 0
    %v135 = vsel %vm115, %v88, 0
    %v138 = vsel %vm115, %v89, 0
    %vm140 = vcmask 1040384
    %v142 = vsel %vm140, %v111, 0
    %144 = vmatprep.subr.bf16.mxu0 0
    %145 = vmatpush1.bf16.msra.mxu0 0
    %146 = vmatprep.subr.bf16.mxu0 0
    %147 = vmatpush1.bf16.msra.mxu0 0
    %148 = vmatprep.subr.bf16.mxu0 0
    %149 = vmatpush1.bf16.msra.mxu0 0
    %150 = vmatprep.subr.bf16.mxu0 0
    %151 = vmatpush1.bf16.msra.mxu0 0
    %152 = vmatprep.subr.bf16.mxu0 0
    %153 = vmatpush1.bf16.msra.mxu0 %v142
    %154 = vmatprep.subr.bf16.mxu0 0
    %155 = vmatpush1.bf16.msra.mxu0 %v110
    %156 = vmatprep.subr.bf16.mxu0 0
    %157 = vmatpush1.bf16.msra.mxu0 %v109
    %158 = vmatprep.subr.bf16.mxu0 0
    %159 = vmatpush1.bf16.msra.mxu0 %v108
    %160 = vmatprep.subr.bf16.mxu0 0
    %161 = vmatpush2.bf16.msra.mxu0 0
    %162 = vmatprep.subr.bf16.mxu0 0
    %163 = vmatpush2.bf16.msra.mxu0 0
    %164 = vmatprep.subr.bf16.mxu0 0
    %165 = vmatpush2.bf16.msra.mxu0 0
    %166 = vmatprep.subr.bf16.mxu0 0
    %167 = vmatpush2.bf16.msra.mxu0 0
    %168 = vmatprep.subr.bf16.mxu0 0
    %169 = vmatpush2.bf16.msra.mxu0 0
    %170 = vmatprep.subr.bf16.mxu0 0
    %171 = vmatpush2.bf16.msra.mxu0 0
    %172 = vmatprep.subr.bf16.mxu0 0
    %173 = vmatpush2.bf16.msra.mxu0 0
    %174 = vmatprep.subr.bf16.mxu0 0
    %175 = vmatpush2.bf16.msra.mxu0 0
    %176 = vmatprep.mubr.bf16.mxu0 0
    %177 = vmatmul.mubr.bf16.gmra.mxu0 %v117
    %v178 = vpop.f32.mrf.mxu0
    %v179 = vadd.f32 %v93, %v178
    %v180 = vpop.f32.mrf.mxu0
    %v181 = vpop.f32.mrf.mxu0
    %v182 = vadd.f32 %v93, %v181
    %v183 = vpop.f32.mrf.mxu0
    %184 = vmatprep.mubr.bf16.mxu0 0
    %185 = vmatmul.mubr.bf16.gmra.mxu0 %v120
    %v186 = vpop.f32.mrf.mxu0
    %v187 = vadd.f32 %v93, %v186
    %v188 = vpop.f32.mrf.mxu0
    %v189 = vpop.f32.mrf.mxu0
    %v190 = vadd.f32 %v93, %v189
    %v191 = vpop.f32.mrf.mxu0
    %192 = vmatprep.mubr.bf16.mxu0 0
    %193 = vmatmul.mubr.bf16.gmra.mxu0 %v123
    %v194 = vpop.f32.mrf.mxu0
    %v195 = vadd.f32 %v93, %v194
    %v196 = vpop.f32.mrf.mxu0
    %v197 = vpop.f32.mrf.mxu0
    %v198 = vadd.f32 %v93, %v197
    %v199 = vpop.f32.mrf.mxu0
    %200 = vmatprep.mubr.bf16.mxu0 0
    %201 = vmatmul.mubr.bf16.gmra.mxu0 %v126
    %v202 = vpop.f32.mrf.mxu0
    %v203 = vadd.f32 %v93, %v202
    %v204 = vpop.f32.mrf.mxu0
    %v205 = vpop.f32.mrf.mxu0
    %v206 = vadd.f32 %v93, %v205
    %v207 = vpop.f32.mrf.mxu0
    %208 = vmatprep.mubr.bf16.mxu0 0
    %209 = vmatmul.mubr.bf16.gmra.mxu0 %v129
    %v210 = vpop.f32.mrf.mxu0
    %v211 = vadd.f32 %v93, %v210
    %v212 = vpop.f32.mrf.mxu0
    %v213 = vpop.f32.mrf.mxu0
    %v214 = vadd.f32 %v93, %v213
    %v215 = vpop.f32.mrf.mxu0
    %216 = vmatprep.mubr.bf16.mxu0 0
    %217 = vmatmul.mubr.bf16.gmra.mxu0 %v132
    %v218 = vpop.f32.mrf.mxu0
    %v219 = vadd.f32 %v93, %v218
    %v220 = vpop.f32.mrf.mxu0
    %v221 = vpop.f32.mrf.mxu0
    %v222 = vadd.f32 %v93, %v221
    %v223 = vpop.f32.mrf.mxu0
    %224 = vmatprep.mubr.bf16.mxu0 0
    %225 = vmatmul.mubr.bf16.gmra.mxu0 %v135
    %v226 = vpop.f32.mrf.mxu0
    %v227 = vadd.f32 %v93, %v226
    %v228 = vpop.f32.mrf.mxu0
    %v229 = vpop.f32.mrf.mxu0
    %v230 = vadd.f32 %v93, %v229
    %v231 = vpop.f32.mrf.mxu0
    %232 = vmatprep.mubr.bf16.mxu0 0
    %233 = vmatmul.mubr.bf16.gmra.mxu0 %v138
    %v234 = vpop.f32.mrf.mxu0
    %v235 = vadd.f32 %v93, %v234
    %v236 = vpop.f32.mrf.mxu0
    %v237 = vpop.f32.mrf.mxu0
    %v238 = vadd.f32 %v93, %v237
    %v239 = vpop.f32.mrf.mxu0
    %240 = vdwg.mxu0
    %vm241 = vcmp.gt.f32.partialorder %v179, 0.0
    %vm242 = vcmp.gt.f32.partialorder %v182, 0.0
    %vm243 = vcmp.gt.f32.partialorder %v187, 0.0
    %vm244 = vcmp.gt.f32.partialorder %v190, 0.0
    %vm245 = vcmp.gt.f32.partialorder %v195, 0.0
    %vm246 = vcmp.gt.f32.partialorder %v198, 0.0
    %vm247 = vcmp.gt.f32.partialorder %v203, 0.0
    %vm248 = vcmp.gt.f32.partialorder %v206, 0.0
    %vm249 = vcmp.gt.f32.partialorder %v211, 0.0
    %vm250 = vcmp.gt.f32.partialorder %v214, 0.0
    %vm251 = vcmp.gt.f32.partialorder %v219, 0.0
    %vm252 = vcmp.gt.f32.partialorder %v222, 0.0
    %vm253 = vcmp.gt.f32.partialorder %v227, 0.0
    %vm254 = vcmp.gt.f32.partialorder %v230, 0.0
    %vm255 = vcmp.gt.f32.partialorder %v235, 0.0
    %vm256 = vcmp.gt.f32.partialorder %v238, 0.0
    %v257 = vmul.f32 %v179, 0.01
    %v258 = vmul.f32 %v182, 0.01
    %v259 = vmul.f32 %v187, 0.01
    %v260 = vmul.f32 %v190, 0.01
    %v261 = vmul.f32 %v195, 0.01
    %v262 = vmul.f32 %v198, 0.01
    %v263 = vmul.f32 %v203, 0.01
    %v264 = vmul.f32 %v206, 0.01
    %v265 = vmul.f32 %v211, 0.01
    %v266 = vmul.f32 %v214, 0.01
    %v267 = vmul.f32 %v219, 0.01
    %v268 = vmul.f32 %v222, 0.01
    %v269 = vmul.f32 %v227, 0.01
    %v270 = vmul.f32 %v230, 0.01
    %v271 = vmul.f32 %v235, 0.01
    %v272 = vmul.f32 %v238, 0.01
    %v273 = vsel %vm241, %v179, %v257
    %v274 = vsel %vm242, %v182, %v258
    %v275 = vsel %vm243, %v187, %v259
    %v276 = vsel %vm244, %v190, %v260
    %v277 = vsel %vm245, %v195, %v261
    %v278 = vsel %vm246, %v198, %v262
    %v279 = vsel %vm247, %v203, %v263
    %v280 = vsel %vm248, %v206, %v264
    %v281 = vsel %vm249, %v211, %v265
    %v282 = vsel %vm250, %v214, %v266
    %v283 = vsel %vm251, %v219, %v267
    %v284 = vsel %vm252, %v222, %v268
    %v285 = vsel %vm253, %v227, %v269
    %v286 = vsel %vm254, %v230, %v270
    %v287 = vsel %vm255, %v235, %v271
    %v288 = vsel %vm256, %v238, %v272
    %v289 = vpack.c.bf16 %v274, %v273
    %v290 = vpack.c.bf16 %v276, %v275
    %v291 = vpack.c.bf16 %v278, %v277
    %v292 = vpack.c.bf16 %v280, %v279
    %v293 = vpack.c.bf16 %v282, %v281
    %v294 = vpack.c.bf16 %v284, %v283
    %v295 = vpack.c.bf16 %v286, %v285
    %v296 = vpack.c.bf16 %v288, %v287
    %298 = vset.pattern.permute.xlu0 0
    %299 = vperm.xlu0 %298, %v65
    %v300 = vpop.permute.xlu0 %299
    %v303 = vsel %vm115, %v64, 0
    %v306 = vsel %vm115, %v289, 0
    %v309 = vsel %vm115, %v290, 0
    %v312 = vsel %vm115, %v291, 0
    %v315 = vsel %vm115, %v292, 0
    %v318 = vsel %vm115, %v293, 0
    %v321 = vsel %vm115, %v294, 0
    %v324 = vsel %vm115, %v295, 0
    %v327 = vsel %vm115, %v296, 0
    %329 = vmatprep.subr.bf16.mxu0 0
    %330 = vmatpush1.bf16.xpose.msra.mxu0 %v327
    %331 = vmatprep.subr.bf16.mxu0 0
    %332 = vmatpush1.bf16.xpose.msra.mxu0 %v324
    %333 = vmatprep.subr.bf16.mxu0 0
    %334 = vmatpush1.bf16.xpose.msra.mxu0 %v321
    %335 = vmatprep.subr.bf16.mxu0 0
    %336 = vmatpush1.bf16.xpose.msra.mxu0 %v318
    %337 = vmatprep.subr.bf16.mxu0 0
    %338 = vmatpush1.bf16.xpose.msra.mxu0 %v315
    %339 = vmatprep.subr.bf16.mxu0 0
    %340 = vmatpush1.bf16.xpose.msra.mxu0 %v312
    %341 = vmatprep.subr.bf16.mxu0 0
    %342 = vmatpush1.bf16.xpose.msra.mxu0 %v309
    %343 = vmatprep.subr.bf16.mxu0 0
    %344 = vmatpush1.bf16.xpose.msra.mxu0 %v306
    %345 = vmatprep.subr.bf16.mxu0 0
    %346 = vmatpush2.bf16.xpose.msra.mxu0 0
    %347 = vmatprep.subr.bf16.mxu0 0
    %348 = vmatpush2.bf16.xpose.msra.mxu0 0
    %349 = vmatprep.subr.bf16.mxu0 0
    %350 = vmatpush2.bf16.xpose.msra.mxu0 0
    %351 = vmatprep.subr.bf16.mxu0 0
    %352 = vmatpush2.bf16.xpose.msra.mxu0 0
    %353 = vmatprep.subr.bf16.mxu0 0
    %354 = vmatpush2.bf16.xpose.msra.mxu0 0
    %355 = vmatprep.subr.bf16.mxu0 0
    %356 = vmatpush2.bf16.xpose.msra.mxu0 0
    %357 = vmatprep.subr.bf16.mxu0 0
    %358 = vmatpush2.bf16.xpose.msra.mxu0 0
    %359 = vmatprep.subr.bf16.mxu0 0
    %360 = vmatpush2.bf16.xpose.msra.mxu0 0
    %361 = vmatprep.mubr.bf16.mxu0 0
    %362 = vmatmul.mubr.bf16.gmra.mxu0 %v303
    %v363 = vpop.f32.mrf.mxu0
    %v364 = vadd.f32 %v300, %v363
    %v365 = vpop.f32.mrf.mxu0
    %v366 = vpop.f32.mrf.mxu0
    %v367 = vpop.f32.mrf.mxu0
    %368 = vdwg.mxu0
    %v369 = vsub.f32 0.0, %v364
    %v370 = vmul.f32 %v369, 1.442695
    %v371 = vpow.pop %v370
    %v372 = vadd.f32 %v371, 1.0
    %v373 = vrcp.pop %v372
    %v374 = vsub.f32 1.0, %v373
    %v376 = vrot.slane %v373, 7
    %v378 = vsel %vm140, %v374, %v376
    %379 = vst [vmem:[#allocation8] sm:$0x3] %v378
    // Predicated region
    $region26: #{tpu_custom_call.1} parent=1 // pred_check
      _
    $region27: #{tpu_custom_call.1} parent=1 // pred_check_branch
      %381 = sbr.rel (0) target = $region29
    $region28: #{tpu_custom_call.1} parent=1 // pred_region
      %s383 = ssub.s32 32, 32
      %384 = vsyncadd [#allocation4], %s383
      %s386 = sshll.u32 [#allocation8], 4
      %s387 = int_to_ptr.vmem [resolvable:$true] %s386
      %389 = dma.vmem_to_hbm [thread:$0]  %s387, 32, %s3, [#allocation4]
    $region29: #{tpu_custom_call.1} parent=1 // pred_fallthru
      _
    // Predicated region
    $region30: #{tpu_custom_call.1} parent=1 // pred_check
      _
    $region31: #{tpu_custom_call.1} parent=1 // pred_check_branch
      %391 = sbr.rel (0) target = $region33
    $region32: #{tpu_custom_call.1} parent=1 // pred_region
      %392 = dma.done [#allocation4], 32
    $region33: #{tpu_custom_call.1} parent=1 // pred_fallthru
      _
    %393 = vsyncpa [#allocation3], 1
    %394 = vsyncpa [#allocation6], 1
    %395 = vsyncpa [#allocation4], 1

</llo_original>
